<compile_context>
chip_gen: v5e
topology: v5e:2x2
jax: 0.10.0
libtpu: 0.0.40
codegen_flags: <defaults>
</compile_context>

<pallas_src>
import functools
import math

import jax
import jax.numpy as jnp
from jax.experimental import pallas as pl
from jax.experimental.pallas import tpu as pltpu


def _gaussian_sample_kernel(x_ref, w_ref, b_ref, eps_ref, out_ref, *, out_f):
    # Single fused matmul on the MXU: [tb, in_f] @ [in_f, 2*out_f], f32 acc.
    y = jnp.dot(x_ref[...], w_ref[...], preferred_element_type=jnp.float32)
    y = y + b_ref[...].astype(jnp.float32)           # bias broadcast, f32 epilogue

    mu = y[:, :out_f]
    log_var = y[:, out_f:]

    std = jnp.exp(0.5 * log_var)                     # EUP transcendental
    z = mu + std * eps_ref[...].astype(jnp.float32)  # reparametrization, f32

    # One lane-dense store: fused [tb, 3*out_f] slab  [z | mu | log_var].
    out_ref[...] = jnp.concatenate([z, mu, log_var], axis=-1).astype(out_ref.dtype)


def _pick_block_b(B, in_f, out_f, in_itemsize, budget_bytes=24 * 1024 * 1024):
    """Largest batch tile (multiple of 8, <= 1024) whose double-buffered
    footprint stays inside a conservative VMEM budget (sized for v7x)."""

    def footprint(tb):
        per_step = tb * (in_f * in_itemsize + out_f * 4 + 3 * out_f * 4)
        resident = in_f * 2 * out_f * in_itemsize + 2 * out_f * 4
        return 2 * per_step + 2 * resident           # everything double-buffered

    tb = min(1024, max(8, (B + 7) // 8 * 8))
    while tb > 8 and footprint(tb) > budget_bytes:
        tb //= 2
    return tb


def gaussian_sample(x, w_mu, b_mu, w_lv, b_lv, eps, *,
                    compute_dtype=jnp.bfloat16, block_b=None):
    """x: [B, in_f]; w_*: [in_f, out_f] (pre-transposed); b_*: [1, out_f];
    eps: [B, out_f].  Returns (z, mu, log_var), each [B, out_f] float32."""
    B, in_f = x.shape
    out_f = w_mu.shape[1]

    # Fuse the two linear layers into one wide matmul.
    w_cat = jnp.concatenate([w_mu, w_lv], axis=1)              # [in_f, 2*out_f]
    b_cat = jnp.concatenate([b_mu, b_lv], axis=1).astype(jnp.float32)

    if compute_dtype is not None:
        x_c = x.astype(compute_dtype)
        w_c = w_cat.astype(compute_dtype)
    else:
        x_c, w_c = x, w_cat
    eps_c = eps.astype(jnp.float32)

    in_itemsize = jnp.dtype(x_c.dtype).itemsize
    tb = block_b if block_b is not None else _pick_block_b(B, in_f, out_f, in_itemsize)
    tb = min(tb, max(8, (B + 7) // 8 * 8))

    # Pad batch so it divides evenly into tiles (sliced off after the call).
    pad_b = (-B) % tb
    if pad_b:
        x_c = jnp.pad(x_c, ((0, pad_b), (0, 0)))
        eps_c = jnp.pad(eps_c, ((0, pad_b), (0, 0)))
    Bp = B + pad_b
    grid = (Bp // tb,)

    # Explicit VMEM budget: double-buffered tiles + resident weights (+ margin).
    vmem_bytes = int(
        2 * tb * (in_f * in_itemsize + out_f * 4 + 3 * out_f * 4)
        + 2 * (in_f * 2 * out_f * in_itemsize + 2 * out_f * 4)
        + (1 << 20))
    vmem_limit = int(min(max(vmem_bytes, 32 * 1024 * 1024), 64 * 1024 * 1024))

    cost = pl.CostEstimate(
        flops=2 * Bp * in_f * 2 * out_f,
        transcendentals=Bp * out_f,
        bytes_accessed=(x_c.size * in_itemsize + w_c.size * in_itemsize
                        + b_cat.size * 4 + eps_c.size * 4 + Bp * 3 * out_f * 4),
    )

    out = pl.pallas_call(
        functools.partial(_gaussian_sample_kernel, out_f=out_f),
        out_shape=jax.ShapeDtypeStruct((Bp, 3 * out_f), jnp.float32),
        grid=grid,
        in_specs=[
            pl.BlockSpec((tb, in_f), lambda i: (i, 0)),            # x tile
            pl.BlockSpec((in_f, 2 * out_f), lambda i: (0, 0)),     # fused W (resident)
            pl.BlockSpec((1, 2 * out_f), lambda i: (0, 0)),        # fused b (resident)
            pl.BlockSpec((tb, out_f), lambda i: (i, 0)),           # eps tile
        ],
        out_specs=pl.BlockSpec((tb, 3 * out_f), lambda i: (i, 0)),
        compiler_params=pltpu.CompilerParams(
            dimension_semantics=("parallel",),
            vmem_limit_bytes=vmem_limit),
        cost_estimate=cost,
    )(x_c, w_c, b_cat, eps_c)

    z = out[:B, :out_f]
    mu = out[:B, out_f:2 * out_f]
    log_var = out[:B, 2 * out_f:]
    return z, mu, log_var


def init_linear_params(key, in_features, out_features):
    """Deterministic init mirroring nn.Linear: U(-1/sqrt(in), 1/sqrt(in))."""
    kw, kb = jax.random.split(key)
    bound = 1.0 / math.sqrt(in_features)
    # stored transposed: [in, out]
    w = jax.random.uniform(kw, (in_features, out_features), jnp.float32,
                           minval=-bound, maxval=bound)
    b = jax.random.uniform(kb, (1, out_features), jnp.float32,
                           minval=-bound, maxval=bound)
    return w, b


if __name__ == "__main__":
    key = jax.random.PRNGKey(0)
    k_x, k_mu, k_lv, k_eps = jax.random.split(key, 4)

    B, in_features, out_features = 16, 64, 128

    x = jax.random.normal(k_x, (B, in_features), jnp.float32)
    w_mu, b_mu = init_linear_params(k_mu, in_features, out_features)
    w_lv, b_lv = init_linear_params(k_lv, in_features, out_features)
    eps = jax.random.normal(k_eps, (B, out_features), jnp.float32)

    z, mu, log_var = gaussian_sample(x, w_mu, b_mu, w_lv, b_lv, eps)
    jax.block_until_ready((z, mu, log_var))

    # Pure-JAX reference with matching bf16-rounded matmul inputs, f32 math.
    x_r = x.astype(jnp.bfloat16).astype(jnp.float32)
    wmu_r = w_mu.astype(jnp.bfloat16).astype(jnp.float32)
    wlv_r = w_lv.astype(jnp.bfloat16).astype(jnp.float32)
    mu_ref = x_r @ wmu_r + b_mu
    lv_ref = x_r @ wlv_r + b_lv
    z_ref = mu_ref + jnp.exp(0.5 * lv_ref) * eps

    assert jnp.allclose(mu, mu_ref, atol=2e-4, rtol=2e-4)
    assert jnp.allclose(log_var, lv_ref, atol=2e-4, rtol=2e-4)
    assert jnp.allclose(z, z_ref, atol=2e-3, rtol=2e-3)

    print("KERNEL_OK")
</pallas_src>

<mosaic_0001>
module attributes {stable_mosaic.version = 11 : i64} {
  func.func @_gaussian_sample_kernel(%arg0: i32, %arg1: memref<16x64xbf16, #tpu.memory_space<vmem>>, %arg2: memref<64x256xbf16, #tpu.memory_space<vmem>>, %arg3: memref<1x256xf32, #tpu.memory_space<vmem>>, %arg4: memref<16x128xf32, #tpu.memory_space<vmem>>, %arg5: memref<16x384xf32, #tpu.memory_space<vmem>>) attributes {dimension_semantics = [#tpu.dimension_semantics<parallel>], iteration_bounds = array<i64: 1>, scalar_prefetch = 0 : i64, scratch_operands = 0 : i64, tpu.core_type = #tpu.core_type<tc>, window_params = [{transform_indices = @transform_0, window_bounds = array<i64: 16, 64>}, {pipeline_mode = #tpu.pipeline_mode<synchronous>, transform_indices = @transform_1, window_bounds = array<i64: 64, 256>}, {pipeline_mode = #tpu.pipeline_mode<synchronous>, transform_indices = @transform_2, window_bounds = array<i64: 1, 256>}, {transform_indices = @transform_3, window_bounds = array<i64: 16, 128>}, {transform_indices = @transform_4, window_bounds = array<i64: 16, 384>}]} {
    %c0 = arith.constant 0 : index
    %c0_0 = arith.constant 0 : index
    %0 = vector.load %arg1[%c0, %c0_0] : memref<16x64xbf16, #tpu.memory_space<vmem>>, vector<16x64xbf16>
    %c0_1 = arith.constant 0 : index
    %c0_2 = arith.constant 0 : index
    %1 = vector.load %arg2[%c0_1, %c0_2] : memref<64x256xbf16, #tpu.memory_space<vmem>>, vector<64x256xbf16>
    %cst = arith.constant dense<0.000000e+00> : vector<16x256xf32>
    %2 = tpu.matmul %0, %1, %cst {dimension_numbers = #tpu.dot_dimension_numbers<[1], [0], [0], [1], [0, 0, 1, 1], [], []>} : vector<16x64xbf16>, vector<64x256xbf16>, vector<16x256xf32> -> vector<16x256xf32>
    %c0_3 = arith.constant 0 : index
    %c0_4 = arith.constant 0 : index
    %3 = vector.load %arg3[%c0_3, %c0_4] : memref<1x256xf32, #tpu.memory_space<vmem>>, vector<1x256xf32>
    %4 = vector.broadcast %3 : vector<1x256xf32> to vector<16x256xf32>
    %5 = arith.addf %2, %4 : vector<16x256xf32>
    %6 = vector.extract_strided_slice %5 {offsets = [0, 0], sizes = [16, 128], strides = [1, 1]} : vector<16x256xf32> to vector<16x128xf32>
    %7 = vector.extract_strided_slice %5 {offsets = [0, 128], sizes = [16, 128], strides = [1, 1]} : vector<16x256xf32> to vector<16x128xf32>
    %cst_5 = arith.constant 5.000000e-01 : f32
    %8 = vector.broadcast %cst_5 : f32 to vector<16x128xf32>
    %9 = arith.mulf %8, %7 : vector<16x128xf32>
    %10 = math.exp %9 : vector<16x128xf32>
    %c0_6 = arith.constant 0 : index
    %c0_7 = arith.constant 0 : index
    %11 = vector.load %arg4[%c0_6, %c0_7] : memref<16x128xf32, #tpu.memory_space<vmem>>, vector<16x128xf32>
    %12 = arith.mulf %10, %11 : vector<16x128xf32>
    %13 = arith.addf %6, %12 : vector<16x128xf32>
    %14 = tpu.concatenate %13, %6, %7 in 1 : vector<16x128xf32>, vector<16x128xf32>, vector<16x128xf32> -> vector<16x384xf32>
    %c0_8 = arith.constant 0 : index
    %c0_9 = arith.constant 0 : index
    %15 = vector.load %arg5[%c0_8, %c0_9] : memref<16x384xf32, #tpu.memory_space<vmem>>, vector<16x384xf32>
    tpu.vector_store %arg5[%c0_8, %c0_9], %14 {strides = array<i32>} : memref<16x384xf32, #tpu.memory_space<vmem>>, vector<16x384xf32>,
    return
  }
  func.func @transform_0(%arg0: i32) -> (i32, i32) {
    %c0_i32 = arith.constant 0 : i32
    %c0_i32_0 = arith.constant 0 : i32
    return %arg0, %c0_i32 : i32, i32
  }
  func.func @transform_1(%arg0: i32) -> (i32, i32) {
    %c0_i32 = arith.constant 0 : i32
    %c0_i32_0 = arith.constant 0 : i32
    %c0_i32_1 = arith.constant 0 : i32
    return %c0_i32, %c0_i32_0 : i32, i32
  }
  func.func @transform_2(%arg0: i32) -> (i32, i32) {
    %c0_i32 = arith.constant 0 : i32
    %c0_i32_0 = arith.constant 0 : i32
    %c0_i32_1 = arith.constant 0 : i32
    return %c0_i32, %c0_i32_0 : i32, i32
  }
  func.func @transform_3(%arg0: i32) -> (i32, i32) {
    %c0_i32 = arith.constant 0 : i32
    %c0_i32_0 = arith.constant 0 : i32
    return %arg0, %c0_i32 : i32, i32
  }
  func.func @transform_4(%arg0: i32) -> (i32, i32) {
    %c0_i32 = arith.constant 0 : i32
    %c0_i32_0 = arith.constant 0 : i32
    return %arg0, %c0_i32 : i32, i32
  }
}

</mosaic_0001>

<llo_original>
// kernel: tpu_custom_call.1
$region0: #{tpu_custom_call.1}
  #allocation0 [shape = 'u32[]', space=smem, size = 0x4, offset = 0x4, fixed_abs, tag = 'smem constant byte address 0x4 - core index']
  #allocation1 [shape = 'u32[72,128]{1,0:T(1,128)}', space=vmem, size = 0x9000, scoped, tag = 'internal scratch']
  %s0 = inlined_call_operand.hbm [shape: bf16[16,64], index: 0, kind: input, shape index: {}]
  %s1 = inlined_call_operand.hbm [shape: bf16[64,256], index: 1, kind: input, shape index: {}]
  %s2 = inlined_call_operand.hbm [shape: f32[1,256], index: 2, kind: input, shape index: {}]
  %s3 = inlined_call_operand.hbm [shape: f32[16,128], index: 3, kind: input, shape index: {}]
  %s4 = inlined_call_operand.hbm [shape: f32[16,384], index: 4, kind: output, shape index: {}]
  %s5 = sld [smem:[#allocation0]]
  $region42: #{tpu_custom_call.1} parent=0
    _
  %s7 = ssub.s32 1, %s5
  %s8 = scalar_select 0, %s7, %s5
  $region1: #{tpu_custom_call.1} parent=0
    #allocation2 [shape = 'u8[4096]{0}', space=vmem, size = 0x1000, scoped, tag = 'input window, operand 0, single buffered']
    #allocation3 [shape = 's32[1]{0}', space=sflag, size = 0x4, scoped, tag = 'scoped memory for tpu_custom_call.1']
    #allocation4 [shape = 's32[1]{0}', space=sflag, size = 0x4, scoped, tag = 'scoped memory for tpu_custom_call.1']
    #allocation5 [shape = 'u8[32768]{0}', space=vmem, size = 0x8000, scoped, tag = 'input window, operand 1, single buffered']
    #allocation6 [shape = 's32[1]{0}', space=sflag, size = 0x4, scoped, tag = 'scoped memory for tpu_custom_call.1']
    #allocation7 [shape = 'u8[1024]{0}', space=vmem, size = 0x400, scoped, tag = 'input window, operand 2, single buffered']
    #allocation8 [shape = 'u8[8192]{0}', space=vmem, size = 0x2000, scoped, tag = 'input window, operand 3, single buffered']
    #allocation9 [shape = 's32[1]{0}', space=sflag, size = 0x4, scoped, tag = 'scoped memory for tpu_custom_call.1']
    #allocation10 [shape = 'u8[24576]{0}', space=vmem, size = 0x6000, scoped, tag = 'output window, operand 0, single buffered']
    %9 = vsyncpa [#allocation3], 0
    %10 = vsyncpa [#allocation6], 0
    %11 = vsyncpa [#allocation9], 0
    %12 = vsyncpa [#allocation4], 0
    // Predicated region
    $region2: #{tpu_custom_call.1} parent=1 // pred_check
      _
    $region3: #{tpu_custom_call.1} parent=1 // pred_check_branch
      %14 = sbr.rel (0) target = $region5
    $region4: #{tpu_custom_call.1} parent=1 // pred_region
      %16 = vsyncadd [#allocation3], 0
      %s17 = sshll.u32 %s0, 4
      %s18 = int_to_ptr.hbm [resolvable:$true] %s17
      %s19 = sshll.u32 [#allocation2], 4
      %s20 = int_to_ptr.vmem [resolvable:$true] %s19
      %25 = dma.hbm_to_vmem [thread:$0]  %s18, 128, %s20, [#allocation3], 64, 64, 4
    $region5: #{tpu_custom_call.1} parent=1 // pred_fallthru
      _
    // Predicated region
    $region6: #{tpu_custom_call.1} parent=1 // pred_check
      _
    $region7: #{tpu_custom_call.1} parent=1 // pred_check_branch
      %27 = sbr.rel (0) target = $region9
    $region8: #{tpu_custom_call.1} parent=1 // pred_region
      %29 = vsyncadd [#allocation6], 0
      %s30 = sshll.u32 %s1, 4
      %s31 = int_to_ptr.hbm [resolvable:$true] %s30
      %s32 = sshll.u32 [#allocation5], 4
      %s33 = int_to_ptr.vmem [resolvable:$true] %s32
      %38 = dma.hbm_to_vmem [thread:$0]  %s31, 1024, %s33, [#allocation6], 128, 128, 8
    $region9: #{tpu_custom_call.1} parent=1 // pred_fallthru
      _
    // Predicated region
    $region10: #{tpu_custom_call.1} parent=1 // pred_check
      _
    $region11: #{tpu_custom_call.1} parent=1 // pred_check_branch
      %40 = sbr.rel (0) target = $region13
    $region12: #{tpu_custom_call.1} parent=1 // pred_region
      %42 = vsyncadd [#allocation6], 0
      %s44 = sshll.u32 %s2, 4
      %s45 = int_to_ptr.hbm [resolvable:$true] %s44
      %s46 = sshll.u32 [#allocation7], 4
      %s47 = int_to_ptr.vmem [resolvable:$true] %s46
      %49 = dma.hbm_to_vmem [thread:$0]  %s45, 32, %s47, [#allocation6]
    $region13: #{tpu_custom_call.1} parent=1 // pred_fallthru
      _
    // Predicated region
    $region14: #{tpu_custom_call.1} parent=1 // pred_check
      _
    $region15: #{tpu_custom_call.1} parent=1 // pred_check_branch
      %51 = sbr.rel (0) target = $region17
    $region16: #{tpu_custom_call.1} parent=1 // pred_region
      %53 = vsyncadd [#allocation9], 0
      %s54 = sshll.u32 %s3, 4
      %s55 = int_to_ptr.hbm [resolvable:$true] %s54
      %s56 = sshll.u32 [#allocation8], 4
      %s57 = int_to_ptr.vmem [resolvable:$true] %s56
      %62 = dma.hbm_to_vmem [thread:$0]  %s55, 256, %s57, [#allocation9], 128, 128, 8
    $region17: #{tpu_custom_call.1} parent=1 // pred_fallthru
      _
    // Predicated region
    $region18: #{tpu_custom_call.1} parent=1 // pred_check
      _
    $region19: #{tpu_custom_call.1} parent=1 // pred_check_branch
      %64 = sbr.rel (0) target = $region21
    $region20: #{tpu_custom_call.1} parent=1 // pred_region
      %66 = dma.done [#allocation3], 128
    $region21: #{tpu_custom_call.1} parent=1 // pred_fallthru
      _
    // Predicated region
    $region22: #{tpu_custom_call.1} parent=1 // pred_check
      _
    $region23: #{tpu_custom_call.1} parent=1 // pred_check_branch
      %68 = sbr.rel (0) target = $region25
    $region24: #{tpu_custom_call.1} parent=1 // pred_region
      %70 = dma.done [#allocation6], 1024
    $region25: #{tpu_custom_call.1} parent=1 // pred_fallthru
      _
    // Predicated region
    $region26: #{tpu_custom_call.1} parent=1 // pred_check
      _
    $region27: #{tpu_custom_call.1} parent=1 // pred_check_branch
      %72 = sbr.rel (0) target = $region29
    $region28: #{tpu_custom_call.1} parent=1 // pred_region
      %74 = dma.done [#allocation6], 32
    $region29: #{tpu_custom_call.1} parent=1 // pred_fallthru
      _
    // Predicated region
    $region30: #{tpu_custom_call.1} parent=1 // pred_check
      _
    $region31: #{tpu_custom_call.1} parent=1 // pred_check_branch
      %76 = sbr.rel (0) target = $region33
    $region32: #{tpu_custom_call.1} parent=1 // pred_region
      %78 = dma.done [#allocation9], 256
    $region33: #{tpu_custom_call.1} parent=1 // pred_fallthru
      _
    %v80 = vld [vmem:[#allocation2] sm:$0xf]
    %v81 = vld [vmem:[#allocation2 + $0x4] sm:$0xf]
    %v82 = vld [vmem:[#allocation5] sm:$0xff]
    %v83 = vld [vmem:[#allocation5 + $0x8] sm:$0xff]
    %v84 = vld [vmem:[#allocation5 + $0x10] sm:$0xff]
    %v85 = vld [vmem:[#allocation5 + $0x18] sm:$0xff]
    %v86 = vld [vmem:[#allocation5 + $0x20] sm:$0xff]
    %v87 = vld [vmem:[#allocation5 + $0x28] sm:$0xff]
    %v88 = vld [vmem:[#allocation5 + $0x30] sm:$0xff]
    %v89 = vld [vmem:[#allocation5 + $0x38] sm:$0xff]
    %v90 = vld [vmem:[#allocation7] sm:$0x3]
    %v92 = vperm.slane %v90, 0
    %v93 = vperm.slane %v90, 1
    %v98 = vunpack.c.l.b16 %v80
    %v99 = vunpack.c.l.b16 %v81
    %v100 = vpack.c.b16 %v99, %v98
    %v109 = vunpack.c.l.b16 %v82
    %v110 = vunpack.c.h.b16 %v82
    %v111 = vunpack.c.l.b16 %v83
    %v112 = vunpack.c.h.b16 %v83
    %v113 = vunpack.c.l.b16 %v84
    %v114 = vunpack.c.h.b16 %v84
    %v115 = vunpack.c.l.b16 %v85
    %v116 = vunpack.c.h.b16 %v85
    %v117 = vunpack.c.l.b16 %v86
    %v118 = vunpack.c.h.b16 %v86
    %v119 = vunpack.c.l.b16 %v87
    %v120 = vunpack.c.h.b16 %v87
    %v121 = vunpack.c.l.b16 %v88
    %v122 = vunpack.c.h.b16 %v88
    %v123 = vunpack.c.l.b16 %v89
    %v124 = vunpack.c.h.b16 %v89
    %v125 = vpack.c.b16 %v111, %v109
    %v126 = vpack.c.b16 %v112, %v110
    %v127 = vpack.c.b16 %v115, %v113
    %v128 = vpack.c.b16 %v116, %v114
    %v129 = vpack.c.b16 %v119, %v117
    %v130 = vpack.c.b16 %v120, %v118
    %v131 = vpack.c.b16 %v123, %v121
    %v132 = vpack.c.b16 %v124, %v122
    %vm141 = vcmask 523264
    %v143 = vsel %vm141, %v100, 0
    %145 = vmatpush.bf16.msra.mxu0 0
    %146 = vmatpush.bf16.msra.mxu0 0
    %147 = vmatpush.bf16.msra.mxu0 0
    %148 = vmatpush.bf16.msra.mxu0 0
    %149 = vmatpush.bf16.msra.mxu0 %v131
    %150 = vmatpush.bf16.msra.mxu0 %v129
    %151 = vmatpush.bf16.msra.mxu0 %v127
    %152 = vmatpush.bf16.msra.mxu0 %v125
    %153 = vmatmul.bf16.gmra.mxu0 %v143
    %v154 = vpop.f32.mrf.mxu0
    %v155 = vadd.f32 %v92, %v154
    %v156 = vpop.f32.mrf.mxu0
    %v157 = vadd.f32 %v92, %v156
    %158 = vdwg.mxu0
    %159 = vmatpush.bf16.msra.mxu0 0
    %160 = vmatpush.bf16.msra.mxu0 0
    %161 = vmatpush.bf16.msra.mxu0 0
    %162 = vmatpush.bf16.msra.mxu0 0
    %163 = vmatpush.bf16.msra.mxu0 %v132
    %164 = vmatpush.bf16.msra.mxu0 %v130
    %165 = vmatpush.bf16.msra.mxu0 %v128
    %166 = vmatpush.bf16.msra.mxu0 %v126
    %167 = vmatmul.bf16.gmra.mxu0 %v143
    %v168 = vpop.f32.mrf.mxu0
    %v169 = vadd.f32 %v93, %v168
    %v170 = vpop.f32.mrf.mxu0
    %v171 = vadd.f32 %v93, %v170
    %172 = vdwg.mxu0
    %v173 = vmul.f32 %v169, 0.5
    %v174 = vmul.f32 %v171, 0.5
    %v175 = vmul.f32 %v173, 1.442695
    %v176 = vpow.pop %v175
    %v177 = vmul.f32 %v174, 1.442695
    %v178 = vpow.pop %v177
    %v179 = vld [vmem:[#allocation8] sm:$0xff]
    %v180 = vld [vmem:[#allocation8 + $0x8] sm:$0xff]
    %v181 = vmul.f32 %v176, %v179
    %v182 = vmul.f32 %v178, %v180
    %v183 = vadd.f32 %v155, %v181
    %v184 = vadd.f32 %v157, %v182
    %185 = vst [vmem:[#allocation10] sm:$0xff] %v183
    %186 = vst [vmem:[#allocation10 + $0x8] sm:$0xff] %v155
    %187 = vst [vmem:[#allocation10 + $0x10] sm:$0xff] %v169
    %188 = vst [vmem:[#allocation10 + $0x18] sm:$0xff] %v184
    %189 = vst [vmem:[#allocation10 + $0x20] sm:$0xff] %v157
    %190 = vst [vmem:[#allocation10 + $0x28] sm:$0xff] %v171
    // Predicated region
    $region34: #{tpu_custom_call.1} parent=1 // pred_check
      _
    $region35: #{tpu_custom_call.1} parent=1 // pred_check_branch
      %192 = sbr.rel (0) target = $region37
    $region36: #{tpu_custom_call.1} parent=1 // pred_region
      %194 = vsyncadd [#allocation4], 0
      %s195 = sshll.u32 [#allocation10], 4
      %s196 = int_to_ptr.vmem [resolvable:$true] %s195
      %s197 = sshll.u32 %s4, 4
      %s198 = int_to_ptr.hbm [resolvable:$true] %s197
      %203 = dma.vmem_to_hbm [thread:$0]  %s196, 768, %s198, [#allocation4], 384, 384, 24
    $region37: #{tpu_custom_call.1} parent=1 // pred_fallthru
      _
    // Predicated region
    $region38: #{tpu_custom_call.1} parent=1 // pred_check
      _
    $region39: #{tpu_custom_call.1} parent=1 // pred_check_branch
      %205 = sbr.rel (0) target = $region41
    $region40: #{tpu_custom_call.1} parent=1 // pred_region
      %207 = dma.done [#allocation4], 768
    $region41: #{tpu_custom_call.1} parent=1 // pred_fallthru
      _
    %208 = vsyncpa [#allocation3], 1
    %209 = vsyncpa [#allocation6], 1
    %210 = vsyncpa [#allocation9], 1
    %211 = vsyncpa [#allocation4], 1

</llo_original>
